<compile_context>
chip_gen: v6e
topology: v6e:2x2x1
jax: 0.10.0
libtpu: 0.0.40
codegen_flags: <defaults>
</compile_context>

<pallas_src>
import math

import jax
import jax.numpy as jnp
import numpy as np
from jax import lax
from jax.experimental import pallas as pl
from jax.experimental.pallas import tpu as pltpu


# ------------------------------- helpers -------------------------------------
def _round_up(x, m):
    return ((x + m - 1) // m) * m


def _pick_batch_tile(batch):
    """Tile the batch across the grid when it splits into sublane-sized chunks."""
    if batch <= 8 or batch % 8 != 0:
        return batch                      # single full-dim block (grid=(1,))
    tb = 8
    while tb * 2 <= 128 and batch % (tb * 2) == 0:
        tb *= 2
    return tb


# ----------------------------- Pallas kernel --------------------------------
def _make_rnn_kernel(seq_len, hidden_pad):
    hold_whh_in_vregs = hidden_pad <= 128     # 128x128 f32 = 16 vregs, safe
    unroll = True if seq_len <= 16 else 4     # bounded unroll for long seqs

    def kernel(xw_ref, whh_ref, o_ref):
        # xw_ref:  VMEM (n, TB, Hp)  precomputed x_t @ W_ih^T + bias (gather hoisted)
        # whh_ref: VMEM (Hp, Hp)     W_hh^T, zero-padded
        # o_ref:   VMEM (TB, Hp)     last hidden state
        whh = whh_ref[...] if hold_whh_in_vregs else None

        def step(t, h):
            w = whh if hold_whh_in_vregs else whh_ref[...]
            # One MXU dot + VPU add + EUP tanh on the serial h-dependency chain.
            return jnp.tanh(
                xw_ref[t] + jnp.dot(h, w, preferred_element_type=jnp.float32)
            )

        tb = o_ref.shape[0]
        h0 = jnp.zeros((tb, hidden_pad), jnp.float32)
        o_ref[...] = lax.fori_loop(0, seq_len, step, h0, unroll=unroll)

    return kernel


def rnn_last_hidden(xw, w_hh_pad):
    """xw: (n, B, Hp) f32 precomputed input projections; w_hh_pad: (Hp, Hp) f32."""
    n, B, Hp = xw.shape
    tb = _pick_batch_tile(B)
    grid = (B // tb,)

    grid_spec = pltpu.PrefetchScalarGridSpec(
        num_scalar_prefetch=0,
        grid=grid,
        in_specs=[
            pl.BlockSpec((n, tb, Hp), lambda i: (0, i, 0)),   # xw (batch-tiled)
            pl.BlockSpec((Hp, Hp), lambda i: (0, 0)),         # W_hh (full, resident)
        ],
        out_specs=pl.BlockSpec((tb, Hp), lambda i: (i, 0)),
    )

    return pl.pallas_call(
        _make_rnn_kernel(n, Hp),
        out_shape=jax.ShapeDtypeStruct((B, Hp), jnp.float32),
        grid_spec=grid_spec,
        compiler_params=pltpu.CompilerParams(
            dimension_semantics=("parallel",)     # batch tiles -> both TCs on v7x
        ),
    )(xw, w_hh_pad)


# ------------------------------ module wrapper -------------------------------
class FullTwoThinningRecurrentNetPallas:
    def __init__(self, n, max_threshold, max_possible_load, hidden_size=64, key=None):
        self.n = n
        self.max_threshold = max_threshold
        self.max_possible_load = max_possible_load
        self.hidden_size = hidden_size
        self.input_size = max_possible_load + 1

        if key is None:
            key = jax.random.PRNGKey(0)
        k1, k2, k3, k4 = jax.random.split(key, 4)
        bound = 1.0 / math.sqrt(hidden_size)   # PyTorch nn.RNN default init range
        C, H = self.input_size, hidden_size
        # Stored pre-transposed relative to torch's (H, C)/(H, H) so the math is x @ W.
        self.w_ih = jax.random.uniform(k1, (C, H), jnp.float32, -bound, bound)
        self.w_hh = jax.random.uniform(k2, (H, H), jnp.float32, -bound, bound)
        b_ih = jax.random.uniform(k3, (H,), jnp.float32, -bound, bound)
        b_hh = jax.random.uniform(k4, (H,), jnp.float32, -bound, bound)
        self.b = (b_ih + b_hh).reshape(1, H)

        # Kernel-side parameters: bias folded into W_ih rows; hidden dim zero-
        # padded to a lane-dense multiple of 128 (padded lanes stay exactly 0
        # through the whole recurrence, so the result is unchanged).
        Hp = _round_up(H, 128)
        w_ih_b = self.w_ih + self.b                                    # (C, H)
        self._w_ih_b_pad = jnp.zeros((C, Hp), jnp.float32).at[:, :H].set(w_ih_b)
        self._w_hh_pad = jnp.zeros((Hp, Hp), jnp.float32).at[:H, :H].set(self.w_hh)
        self._hidden_pad = Hp

        C_minus_1 = C - 1

        def _forward(x_int, w_ih_b_pad, w_hh_pad):
            # x.sort()[0]; one-hot @ W_ih replaced by a row gather, hoisted out
            # of the recurrence (it does not depend on h).
            x_sorted = jnp.sort(x_int, axis=-1).astype(jnp.int32)
            # torch's F.one_hot would raise on out-of-range values; we clamp
            # instead (documented deviation) so the gather stays in bounds.
            x_sorted = jnp.clip(x_sorted, 0, C_minus_1)
            xw = jnp.take(w_ih_b_pad, x_sorted, axis=0)    # (B, n, Hp)
            xw = jnp.transpose(xw, (1, 0, 2))              # (n, B, Hp) time-major
            h_last = rnn_last_hidden(xw, w_hh_pad)         # (B, Hp)
            return h_last[:, :H]

        self._forward = jax.jit(_forward)   # one fused trace: sort + gather + kernel

    def __call__(self, x_int):
        # x_int: (B, n) integer bin loads -> (B, hidden_size) last hidden state
        return self._forward(x_int, self._w_ih_b_pad, self._w_hh_pad)

    # Pure-JAX reference (one-hot + lax.scan) for verification.
    def reference(self, x_int):
        x_sorted = jnp.sort(x_int, axis=-1)
        onehot = jax.nn.one_hot(x_sorted, self.input_size, dtype=jnp.float32)  # (B, n, C)
        x_tm = jnp.transpose(onehot, (1, 0, 2))  # (n, B, C)
        B = x_int.shape[0]
        h0 = jnp.zeros((B, self.hidden_size), jnp.float32)

        def step(h, xt):
            h_new = jnp.tanh(xt @ self.w_ih + h @ self.w_hh + self.b)
            return h_new, None

        h_last, _ = lax.scan(step, h0, x_tm)
        return h_last


# ---------------------------------- main -------------------------------------
if __name__ == "__main__":
    # Small shapes consistent with the module: n bins = seq len 8,
    # max_possible_load = 15 -> one-hot width 16, hidden = 32, batch = 2.
    n = 8
    max_possible_load = 15
    max_threshold = 4
    hidden_size = 32
    batch = 2

    key = jax.random.PRNGKey(0)
    k_params, k_input = jax.random.split(key)

    net = FullTwoThinningRecurrentNetPallas(
        n=n,
        max_threshold=max_threshold,
        max_possible_load=max_possible_load,
        hidden_size=hidden_size,
        key=k_params,
    )

    x = jax.random.randint(k_input, (batch, n), 0, max_possible_load + 1, dtype=jnp.int32)

    out = jax.block_until_ready(net(x))
    ref = jax.block_until_ready(net.reference(x))
    np.testing.assert_allclose(np.asarray(out), np.asarray(ref), rtol=1e-5, atol=1e-5)

    assert out.shape == (batch, hidden_size)
    print("KERNEL_OK")
</pallas_src>

<mosaic_0001>
module attributes {stable_mosaic.version = 11 : i64} {
  func.func @kernel(%arg0: i32, %arg1: memref<8x2x128xf32, #tpu.memory_space<vmem>>, %arg2: memref<128x128xf32, #tpu.memory_space<vmem>>, %arg3: memref<2x128xf32, #tpu.memory_space<vmem>>) attributes {dimension_semantics = [#tpu.dimension_semantics<parallel>], iteration_bounds = array<i64: 1>, scalar_prefetch = 0 : i64, scratch_operands = 0 : i64, tpu.core_type = #tpu.core_type<tc>, window_params = [{transform_indices = @transform_0, window_bounds = array<i64: 8, 2, 128>}, {pipeline_mode = #tpu.pipeline_mode<synchronous>, transform_indices = @transform_1, window_bounds = array<i64: 128, 128>}, {transform_indices = @transform_2, window_bounds = array<i64: 2, 128>}]} {
    %c0 = arith.constant 0 : index
    %c0_0 = arith.constant 0 : index
    %0 = vector.load %arg2[%c0, %c0_0] : memref<128x128xf32, #tpu.memory_space<vmem>>, vector<128x128xf32>
    %cst = arith.constant 0.000000e+00 : f32
    %1 = vector.broadcast %cst : f32 to vector<2x128xf32>
    %c0_i32 = arith.constant 0 : i32
    %2 = arith.index_cast %c0_i32 : i32 to index
    %c0_1 = arith.constant 0 : index
    %c0_2 = arith.constant 0 : index
    %3 = vector.load %arg1[%2, %c0_1, %c0_2] : memref<8x2x128xf32, #tpu.memory_space<vmem>>, vector<1x2x128xf32>
    %4 = vector.shape_cast %3 : vector<1x2x128xf32> to vector<2x128xf32>
    %cst_3 = arith.constant dense<0.000000e+00> : vector<2x128xf32>
    %5 = tpu.matmul %1, %0, %cst_3 {dimension_numbers = #tpu.dot_dimension_numbers<[1], [0], [0], [1], [0, 0, 1, 1], [], []>} : vector<2x128xf32>, vector<128x128xf32>, vector<2x128xf32> -> vector<2x128xf32>
    %6 = arith.addf %4, %5 : vector<2x128xf32>
    %7 = math.tanh %6 : vector<2x128xf32>
    %c1_i32 = arith.constant 1 : i32
    %8 = arith.index_cast %c1_i32 : i32 to index
    %c0_4 = arith.constant 0 : index
    %c0_5 = arith.constant 0 : index
    %9 = vector.load %arg1[%8, %c0_4, %c0_5] : memref<8x2x128xf32, #tpu.memory_space<vmem>>, vector<1x2x128xf32>
    %10 = vector.shape_cast %9 : vector<1x2x128xf32> to vector<2x128xf32>
    %cst_6 = arith.constant dense<0.000000e+00> : vector<2x128xf32>
    %11 = tpu.matmul %7, %0, %cst_6 {dimension_numbers = #tpu.dot_dimension_numbers<[1], [0], [0], [1], [0, 0, 1, 1], [], []>} : vector<2x128xf32>, vector<128x128xf32>, vector<2x128xf32> -> vector<2x128xf32>
    %12 = arith.addf %10, %11 : vector<2x128xf32>
    %13 = math.tanh %12 : vector<2x128xf32>
    %c2_i32 = arith.constant 2 : i32
    %14 = arith.index_cast %c2_i32 : i32 to index
    %c0_7 = arith.constant 0 : index
    %c0_8 = arith.constant 0 : index
    %15 = vector.load %arg1[%14, %c0_7, %c0_8] : memref<8x2x128xf32, #tpu.memory_space<vmem>>, vector<1x2x128xf32>
    %16 = vector.shape_cast %15 : vector<1x2x128xf32> to vector<2x128xf32>
    %cst_9 = arith.constant dense<0.000000e+00> : vector<2x128xf32>
    %17 = tpu.matmul %13, %0, %cst_9 {dimension_numbers = #tpu.dot_dimension_numbers<[1], [0], [0], [1], [0, 0, 1, 1], [], []>} : vector<2x128xf32>, vector<128x128xf32>, vector<2x128xf32> -> vector<2x128xf32>
    %18 = arith.addf %16, %17 : vector<2x128xf32>
    %19 = math.tanh %18 : vector<2x128xf32>
    %c3_i32 = arith.constant 3 : i32
    %20 = arith.index_cast %c3_i32 : i32 to index
    %c0_10 = arith.constant 0 : index
    %c0_11 = arith.constant 0 : index
    %21 = vector.load %arg1[%20, %c0_10, %c0_11] : memref<8x2x128xf32, #tpu.memory_space<vmem>>, vector<1x2x128xf32>
    %22 = vector.shape_cast %21 : vector<1x2x128xf32> to vector<2x128xf32>
    %cst_12 = arith.constant dense<0.000000e+00> : vector<2x128xf32>
    %23 = tpu.matmul %19, %0, %cst_12 {dimension_numbers = #tpu.dot_dimension_numbers<[1], [0], [0], [1], [0, 0, 1, 1], [], []>} : vector<2x128xf32>, vector<128x128xf32>, vector<2x128xf32> -> vector<2x128xf32>
    %24 = arith.addf %22, %23 : vector<2x128xf32>
    %25 = math.tanh %24 : vector<2x128xf32>
    %c4_i32 = arith.constant 4 : i32
    %26 = arith.index_cast %c4_i32 : i32 to index
    %c0_13 = arith.constant 0 : index
    %c0_14 = arith.constant 0 : index
    %27 = vector.load %arg1[%26, %c0_13, %c0_14] : memref<8x2x128xf32, #tpu.memory_space<vmem>>, vector<1x2x128xf32>
    %28 = vector.shape_cast %27 : vector<1x2x128xf32> to vector<2x128xf32>
    %cst_15 = arith.constant dense<0.000000e+00> : vector<2x128xf32>
    %29 = tpu.matmul %25, %0, %cst_15 {dimension_numbers = #tpu.dot_dimension_numbers<[1], [0], [0], [1], [0, 0, 1, 1], [], []>} : vector<2x128xf32>, vector<128x128xf32>, vector<2x128xf32> -> vector<2x128xf32>
    %30 = arith.addf %28, %29 : vector<2x128xf32>
    %31 = math.tanh %30 : vector<2x128xf32>
    %c5_i32 = arith.constant 5 : i32
    %32 = arith.index_cast %c5_i32 : i32 to index
    %c0_16 = arith.constant 0 : index
    %c0_17 = arith.constant 0 : index
    %33 = vector.load %arg1[%32, %c0_16, %c0_17] : memref<8x2x128xf32, #tpu.memory_space<vmem>>, vector<1x2x128xf32>
    %34 = vector.shape_cast %33 : vector<1x2x128xf32> to vector<2x128xf32>
    %cst_18 = arith.constant dense<0.000000e+00> : vector<2x128xf32>
    %35 = tpu.matmul %31, %0, %cst_18 {dimension_numbers = #tpu.dot_dimension_numbers<[1], [0], [0], [1], [0, 0, 1, 1], [], []>} : vector<2x128xf32>, vector<128x128xf32>, vector<2x128xf32> -> vector<2x128xf32>
    %36 = arith.addf %34, %35 : vector<2x128xf32>
    %37 = math.tanh %36 : vector<2x128xf32>
    %c6_i32 = arith.constant 6 : i32
    %38 = arith.index_cast %c6_i32 : i32 to index
    %c0_19 = arith.constant 0 : index
    %c0_20 = arith.constant 0 : index
    %39 = vector.load %arg1[%38, %c0_19, %c0_20] : memref<8x2x128xf32, #tpu.memory_space<vmem>>, vector<1x2x128xf32>
    %40 = vector.shape_cast %39 : vector<1x2x128xf32> to vector<2x128xf32>
    %cst_21 = arith.constant dense<0.000000e+00> : vector<2x128xf32>
    %41 = tpu.matmul %37, %0, %cst_21 {dimension_numbers = #tpu.dot_dimension_numbers<[1], [0], [0], [1], [0, 0, 1, 1], [], []>} : vector<2x128xf32>, vector<128x128xf32>, vector<2x128xf32> -> vector<2x128xf32>
    %42 = arith.addf %40, %41 : vector<2x128xf32>
    %43 = math.tanh %42 : vector<2x128xf32>
    %c7_i32 = arith.constant 7 : i32
    %44 = arith.index_cast %c7_i32 : i32 to index
    %c0_22 = arith.constant 0 : index
    %c0_23 = arith.constant 0 : index
    %45 = vector.load %arg1[%44, %c0_22, %c0_23] : memref<8x2x128xf32, #tpu.memory_space<vmem>>, vector<1x2x128xf32>
    %46 = vector.shape_cast %45 : vector<1x2x128xf32> to vector<2x128xf32>
    %cst_24 = arith.constant dense<0.000000e+00> : vector<2x128xf32>
    %47 = tpu.matmul %43, %0, %cst_24 {dimension_numbers = #tpu.dot_dimension_numbers<[1], [0], [0], [1], [0, 0, 1, 1], [], []>} : vector<2x128xf32>, vector<128x128xf32>, vector<2x128xf32> -> vector<2x128xf32>
    %48 = arith.addf %46, %47 : vector<2x128xf32>
    %49 = math.tanh %48 : vector<2x128xf32>
    %c8_i32 = arith.constant 8 : i32
    %c0_25 = arith.constant 0 : index
    %c0_26 = arith.constant 0 : index
    %50 = vector.load %arg3[%c0_25, %c0_26] : memref<2x128xf32, #tpu.memory_space<vmem>>, vector<2x128xf32>
    tpu.vector_store %arg3[%c0_25, %c0_26], %49 {strides = array<i32>} : memref<2x128xf32, #tpu.memory_space<vmem>>, vector<2x128xf32>,
    return
  }
  func.func @transform_0(%arg0: i32) -> (i32, i32, i32) {
    %c0_i32 = arith.constant 0 : i32
    %c0_i32_0 = arith.constant 0 : i32
    %c0_i32_1 = arith.constant 0 : i32
    return %c0_i32, %arg0, %c0_i32_0 : i32, i32, i32
  }
  func.func @transform_1(%arg0: i32) -> (i32, i32) {
    %c0_i32 = arith.constant 0 : i32
    %c0_i32_0 = arith.constant 0 : i32
    %c0_i32_1 = arith.constant 0 : i32
    return %c0_i32, %c0_i32_0 : i32, i32
  }
  func.func @transform_2(%arg0: i32) -> (i32, i32) {
    %c0_i32 = arith.constant 0 : i32
    %c0_i32_0 = arith.constant 0 : i32
    return %arg0, %c0_i32 : i32, i32
  }
}

</mosaic_0001>

<llo_original>
// kernel: _forward.1
$region0: #{_forward.1}
  #allocation0 [shape = 'u32[]', space=smem, size = 0x4, offset = 0x4, fixed_abs, tag = 'smem constant byte address 0x4 - core index']
  #allocation1 [shape = 'u32[144,128]{1,0:T(1,128)}', space=vmem, size = 0x12000, scoped, tag = 'internal scratch']
  %s0 = inlined_call_operand.vmem [shape: f32[8,2,128], index: 0, kind: input, shape index: {}]
  %s1 = inlined_call_operand.vmem [shape: f32[128,128], index: 1, kind: input, shape index: {}]
  %s2 = inlined_call_operand.hbm [shape: f32[2,128], index: 2, kind: output, shape index: {}]
  %s3 = sld [smem:[#allocation0]]
  $region18: #{_forward.1} parent=0
    _
  %s5 = ssub.s32 1, %s3
  %s6 = scalar_select 0, %s5, %s3
  $region1: #{_forward.1} parent=0
    #allocation2 [shape = 'u8[1024]{0}', space=vmem, size = 0x400, scoped, tag = 'output window, operand 0, single buffered']
    #allocation3 [shape = 's32[1]{0}', space=sflag, size = 0x4, scoped, tag = 'scoped memory for _forward.1']
    %7 = vsyncpa [#allocation3], 0
    // Predicated region
    $region2: #{_forward.1} parent=1 // pred_check
      _
    $region3: #{_forward.1} parent=1 // pred_check_branch
      %9 = sbr.rel (0) target = $region5
    $region4: #{_forward.1} parent=1 // pred_region
      _
    $region5: #{_forward.1} parent=1 // pred_fallthru
      _
    // Predicated region
    $region6: #{_forward.1} parent=1 // pred_check
      _
    $region7: #{_forward.1} parent=1 // pred_check_branch
      %11 = sbr.rel (0) target = $region9
    $region8: #{_forward.1} parent=1 // pred_region
      _
    $region9: #{_forward.1} parent=1 // pred_fallthru
      _
    %v12 = vld [vmem:[%s1] sm:$0xff]
    %v13 = vld [vmem:[%s1 + $0x8] sm:$0xff]
    %v14 = vld [vmem:[%s1 + $0x10] sm:$0xff]
    %v15 = vld [vmem:[%s1 + $0x18] sm:$0xff]
    %v16 = vld [vmem:[%s1 + $0x20] sm:$0xff]
    %v17 = vld [vmem:[%s1 + $0x28] sm:$0xff]
    %v18 = vld [vmem:[%s1 + $0x30] sm:$0xff]
    %v19 = vld [vmem:[%s1 + $0x38] sm:$0xff]
    %v20 = vld [vmem:[%s1 + $0x40] sm:$0xff]
    %v21 = vld [vmem:[%s1 + $0x48] sm:$0xff]
    %v22 = vld [vmem:[%s1 + $0x50] sm:$0xff]
    %v23 = vld [vmem:[%s1 + $0x58] sm:$0xff]
    %v24 = vld [vmem:[%s1 + $0x60] sm:$0xff]
    %v25 = vld [vmem:[%s1 + $0x68] sm:$0xff]
    %v26 = vld [vmem:[%s1 + $0x70] sm:$0xff]
    %v27 = vld [vmem:[%s1 + $0x78] sm:$0xff]
    %v28 = vld [vmem:[%s0] sm:$0x3]
    %29 = vmatprep.subr.mxu0 0.0
    %30 = vmatpush1.msra.mxu0 %v27
    %31 = vmatprep.subr.mxu0 0.0
    %32 = vmatpush1.msra.mxu0 %v26
    %33 = vmatprep.subr.mxu0 0.0
    %34 = vmatpush1.msra.mxu0 %v25
    %35 = vmatprep.subr.mxu0 0.0
    %36 = vmatpush1.msra.mxu0 %v24
    %37 = vmatprep.subr.mxu0 0.0
    %38 = vmatpush1.msra.mxu0 %v23
    %39 = vmatprep.subr.mxu0 0.0
    %40 = vmatpush1.msra.mxu0 %v22
    %41 = vmatprep.subr.mxu0 0.0
    %42 = vmatpush1.msra.mxu0 %v21
    %43 = vmatprep.subr.mxu0 0.0
    %44 = vmatpush1.msra.mxu0 %v20
    %45 = vmatprep.subr.mxu0 0.0
    %46 = vmatpush1.msra.mxu0 %v19
    %47 = vmatprep.subr.mxu0 0.0
    %48 = vmatpush1.msra.mxu0 %v18
    %49 = vmatprep.subr.mxu0 0.0
    %50 = vmatpush1.msra.mxu0 %v17
    %51 = vmatprep.subr.mxu0 0.0
    %52 = vmatpush1.msra.mxu0 %v16
    %53 = vmatprep.subr.mxu0 0.0
    %54 = vmatpush1.msra.mxu0 %v15
    %55 = vmatprep.subr.mxu0 0.0
    %56 = vmatpush1.msra.mxu0 %v14
    %57 = vmatprep.subr.mxu0 0.0
    %58 = vmatpush1.msra.mxu0 %v13
    %59 = vmatprep.subr.mxu0 0.0
    %60 = vmatpush1.msra.mxu0 %v12
    %61 = vmatprep.subr.mxu0 0.0
    %62 = vmatpush2.msra.mxu0 0.0
    %63 = vmatprep.subr.mxu0 0.0
    %64 = vmatpush2.msra.mxu0 0.0
    %65 = vmatprep.subr.mxu0 0.0
    %66 = vmatpush2.msra.mxu0 0.0
    %67 = vmatprep.subr.mxu0 0.0
    %68 = vmatpush2.msra.mxu0 0.0
    %69 = vmatprep.subr.mxu0 0.0
    %70 = vmatpush2.msra.mxu0 0.0
    %71 = vmatprep.subr.mxu0 0.0
    %72 = vmatpush2.msra.mxu0 0.0
    %73 = vmatprep.subr.mxu0 0.0
    %74 = vmatpush2.msra.mxu0 0.0
    %75 = vmatprep.subr.mxu0 0.0
    %76 = vmatpush2.msra.mxu0 0.0
    %77 = vmatprep.subr.mxu0 0.0
    %78 = vmatpush2.msra.mxu0 0.0
    %79 = vmatprep.subr.mxu0 0.0
    %80 = vmatpush2.msra.mxu0 0.0
    %81 = vmatprep.subr.mxu0 0.0
    %82 = vmatpush2.msra.mxu0 0.0
    %83 = vmatprep.subr.mxu0 0.0
    %84 = vmatpush2.msra.mxu0 0.0
    %85 = vmatprep.subr.mxu0 0.0
    %86 = vmatpush2.msra.mxu0 0.0
    %87 = vmatprep.subr.mxu0 0.0
    %88 = vmatpush2.msra.mxu0 0.0
    %89 = vmatprep.subr.mxu0 0.0
    %90 = vmatpush2.msra.mxu0 0.0
    %91 = vmatprep.subr.mxu0 0.0
    %92 = vmatpush2.msra.mxu0 0.0
    %93 = vmatprep.mubr.f32.mxu0 0.0
    %94 = vmatmul.mubr.f32.gmra.mxu0 0.0
    %v95 = vpop.f32.mrf.mxu0
    %v96 = vadd.f32 0.0, %v95
    %v97 = vpop.f32.mrf.mxu0
    %98 = vdwg.mxu0
    %v99 = vadd.f32 %v28, %v96
    %v100 = vtanh.pop %v99
    %s101 = scalar_lea.vmem %s0, 2
    %v102 = vld [vmem:[%s101] sm:$0x3]
    %103 = vmatprep.subr.mxu0 0.0
    %104 = vmatpush1.msra.mxu0 %v27
    %105 = vmatprep.subr.mxu0 0.0
    %106 = vmatpush1.msra.mxu0 %v26
    %107 = vmatprep.subr.mxu0 0.0
    %108 = vmatpush1.msra.mxu0 %v25
    %109 = vmatprep.subr.mxu0 0.0
    %110 = vmatpush1.msra.mxu0 %v24
    %111 = vmatprep.subr.mxu0 0.0
    %112 = vmatpush1.msra.mxu0 %v23
    %113 = vmatprep.subr.mxu0 0.0
    %114 = vmatpush1.msra.mxu0 %v22
    %115 = vmatprep.subr.mxu0 0.0
    %116 = vmatpush1.msra.mxu0 %v21
    %117 = vmatprep.subr.mxu0 0.0
    %118 = vmatpush1.msra.mxu0 %v20
    %119 = vmatprep.subr.mxu0 0.0
    %120 = vmatpush1.msra.mxu0 %v19
    %121 = vmatprep.subr.mxu0 0.0
    %122 = vmatpush1.msra.mxu0 %v18
    %123 = vmatprep.subr.mxu0 0.0
    %124 = vmatpush1.msra.mxu0 %v17
    %125 = vmatprep.subr.mxu0 0.0
    %126 = vmatpush1.msra.mxu0 %v16
    %127 = vmatprep.subr.mxu0 0.0
    %128 = vmatpush1.msra.mxu0 %v15
    %129 = vmatprep.subr.mxu0 0.0
    %130 = vmatpush1.msra.mxu0 %v14
    %131 = vmatprep.subr.mxu0 0.0
    %132 = vmatpush1.msra.mxu0 %v13
    %133 = vmatprep.subr.mxu0 0.0
    %134 = vmatpush1.msra.mxu0 %v12
    %135 = vmatprep.subr.mxu0 0.0
    %136 = vmatpush2.msra.mxu0 0.0
    %137 = vmatprep.subr.mxu0 0.0
    %138 = vmatpush2.msra.mxu0 0.0
    %139 = vmatprep.subr.mxu0 0.0
    %140 = vmatpush2.msra.mxu0 0.0
    %141 = vmatprep.subr.mxu0 0.0
    %142 = vmatpush2.msra.mxu0 0.0
    %143 = vmatprep.subr.mxu0 0.0
    %144 = vmatpush2.msra.mxu0 0.0
    %145 = vmatprep.subr.mxu0 0.0
    %146 = vmatpush2.msra.mxu0 0.0
    %147 = vmatprep.subr.mxu0 0.0
    %148 = vmatpush2.msra.mxu0 0.0
    %149 = vmatprep.subr.mxu0 0.0
    %150 = vmatpush2.msra.mxu0 0.0
    %151 = vmatprep.subr.mxu0 0.0
    %152 = vmatpush2.msra.mxu0 0.0
    %153 = vmatprep.subr.mxu0 0.0
    %154 = vmatpush2.msra.mxu0 0.0
    %155 = vmatprep.subr.mxu0 0.0
    %156 = vmatpush2.msra.mxu0 0.0
    %157 = vmatprep.subr.mxu0 0.0
    %158 = vmatpush2.msra.mxu0 0.0
    %159 = vmatprep.subr.mxu0 0.0
    %160 = vmatpush2.msra.mxu0 0.0
    %161 = vmatprep.subr.mxu0 0.0
    %162 = vmatpush2.msra.mxu0 0.0
    %163 = vmatprep.subr.mxu0 0.0
    %164 = vmatpush2.msra.mxu0 0.0
    %165 = vmatprep.subr.mxu0 0.0
    %166 = vmatpush2.msra.mxu0 0.0
    %167 = vmatprep.mubr.f32.mxu0 0.0
    %168 = vmatmul.mubr.f32.gmra.mxu0 %v100
    %v169 = vpop.f32.mrf.mxu0
    %v170 = vadd.f32 0.0, %v169
    %v171 = vpop.f32.mrf.mxu0
    %172 = vdwg.mxu0
    %v173 = vadd.f32 %v102, %v170
    %v174 = vtanh.pop %v173
    %s175 = scalar_lea.vmem %s0, 4
    %v176 = vld [vmem:[%s175] sm:$0x3]
    %177 = vmatprep.subr.mxu0 0.0
    %178 = vmatpush1.msra.mxu0 %v27
    %179 = vmatprep.subr.mxu0 0.0
    %180 = vmatpush1.msra.mxu0 %v26
    %181 = vmatprep.subr.mxu0 0.0
    %182 = vmatpush1.msra.mxu0 %v25
    %183 = vmatprep.subr.mxu0 0.0
    %184 = vmatpush1.msra.mxu0 %v24
    %185 = vmatprep.subr.mxu0 0.0
    %186 = vmatpush1.msra.mxu0 %v23
    %187 = vmatprep.subr.mxu0 0.0
    %188 = vmatpush1.msra.mxu0 %v22
    %189 = vmatprep.subr.mxu0 0.0
    %190 = vmatpush1.msra.mxu0 %v21
    %191 = vmatprep.subr.mxu0 0.0
    %192 = vmatpush1.msra.mxu0 %v20
    %193 = vmatprep.subr.mxu0 0.0
    %194 = vmatpush1.msra.mxu0 %v19
    %195 = vmatprep.subr.mxu0 0.0
    %196 = vmatpush1.msra.mxu0 %v18
    %197 = vmatprep.subr.mxu0 0.0
    %198 = vmatpush1.msra.mxu0 %v17
    %199 = vmatprep.subr.mxu0 0.0
    %200 = vmatpush1.msra.mxu0 %v16
    %201 = vmatprep.subr.mxu0 0.0
    %202 = vmatpush1.msra.mxu0 %v15
    %203 = vmatprep.subr.mxu0 0.0
    %204 = vmatpush1.msra.mxu0 %v14
    %205 = vmatprep.subr.mxu0 0.0
    %206 = vmatpush1.msra.mxu0 %v13
    %207 = vmatprep.subr.mxu0 0.0
    %208 = vmatpush1.msra.mxu0 %v12
    %209 = vmatprep.subr.mxu0 0.0
    %210 = vmatpush2.msra.mxu0 0.0
    %211 = vmatprep.subr.mxu0 0.0
    %212 = vmatpush2.msra.mxu0 0.0
    %213 = vmatprep.subr.mxu0 0.0
    %214 = vmatpush2.msra.mxu0 0.0
    %215 = vmatprep.subr.mxu0 0.0
    %216 = vmatpush2.msra.mxu0 0.0
    %217 = vmatprep.subr.mxu0 0.0
    %218 = vmatpush2.msra.mxu0 0.0
    %219 = vmatprep.subr.mxu0 0.0
    %220 = vmatpush2.msra.mxu0 0.0
    %221 = vmatprep.subr.mxu0 0.0
    %222 = vmatpush2.msra.mxu0 0.0
    %223 = vmatprep.subr.mxu0 0.0
    %224 = vmatpush2.msra.mxu0 0.0
    %225 = vmatprep.subr.mxu0 0.0
    %226 = vmatpush2.msra.mxu0 0.0
    %227 = vmatprep.subr.mxu0 0.0
    %228 = vmatpush2.msra.mxu0 0.0
    %229 = vmatprep.subr.mxu0 0.0
    %230 = vmatpush2.msra.mxu0 0.0
    %231 = vmatprep.subr.mxu0 0.0
    %232 = vmatpush2.msra.mxu0 0.0
    %233 = vmatprep.subr.mxu0 0.0
    %234 = vmatpush2.msra.mxu0 0.0
    %235 = vmatprep.subr.mxu0 0.0
    %236 = vmatpush2.msra.mxu0 0.0
    %237 = vmatprep.subr.mxu0 0.0
    %238 = vmatpush2.msra.mxu0 0.0
    %239 = vmatprep.subr.mxu0 0.0
    %240 = vmatpush2.msra.mxu0 0.0
    %241 = vmatprep.mubr.f32.mxu0 0.0
    %242 = vmatmul.mubr.f32.gmra.mxu0 %v174
    %v243 = vpop.f32.mrf.mxu0
    %v244 = vadd.f32 0.0, %v243
    %v245 = vpop.f32.mrf.mxu0
    %246 = vdwg.mxu0
    %v247 = vadd.f32 %v176, %v244
    %v248 = vtanh.pop %v247
    %s249 = scalar_lea.vmem %s0, 6
    %v250 = vld [vmem:[%s249] sm:$0x3]
    %251 = vmatprep.subr.mxu0 0.0
    %252 = vmatpush1.msra.mxu0 %v27
    %253 = vmatprep.subr.mxu0 0.0
    %254 = vmatpush1.msra.mxu0 %v26
    %255 = vmatprep.subr.mxu0 0.0
    %256 = vmatpush1.msra.mxu0 %v25
    %257 = vmatprep.subr.mxu0 0.0
    %258 = vmatpush1.msra.mxu0 %v24
    %259 = vmatprep.subr.mxu0 0.0
    %260 = vmatpush1.msra.mxu0 %v23
    %261 = vmatprep.subr.mxu0 0.0
    %262 = vmatpush1.msra.mxu0 %v22
    %263 = vmatprep.subr.mxu0 0.0
    %264 = vmatpush1.msra.mxu0 %v21
    %265 = vmatprep.subr.mxu0 0.0
    %266 = vmatpush1.msra.mxu0 %v20
    %267 = vmatprep.subr.mxu0 0.0
    %268 = vmatpush1.msra.mxu0 %v19
    %269 = vmatprep.subr.mxu0 0.0
    %270 = vmatpush1.msra.mxu0 %v18
    %271 = vmatprep.subr.mxu0 0.0
    %272 = vmatpush1.msra.mxu0 %v17
    %273 = vmatprep.subr.mxu0 0.0
    %274 = vmatpush1.msra.mxu0 %v16
    %275 = vmatprep.subr.mxu0 0.0
    %276 = vmatpush1.msra.mxu0 %v15
    %277 = vmatprep.subr.mxu0 0.0
    %278 = vmatpush1.msra.mxu0 %v14
    %279 = vmatprep.subr.mxu0 0.0
    %280 = vmatpush1.msra.mxu0 %v13
    %281 = vmatprep.subr.mxu0 0.0
    %282 = vmatpush1.msra.mxu0 %v12
    %283 = vmatprep.subr.mxu0 0.0
    %284 = vmatpush2.msra.mxu0 0.0
    %285 = vmatprep.subr.mxu0 0.0
    %286 = vmatpush2.msra.mxu0 0.0
    %287 = vmatprep.subr.mxu0 0.0
    %288 = vmatpush2.msra.mxu0 0.0
    %289 = vmatprep.subr.mxu0 0.0
    %290 = vmatpush2.msra.mxu0 0.0
    %291 = vmatprep.subr.mxu0 0.0
    %292 = vmatpush2.msra.mxu0 0.0
    %293 = vmatprep.subr.mxu0 0.0
    %294 = vmatpush2.msra.mxu0 0.0
    %295 = vmatprep.subr.mxu0 0.0
    %296 = vmatpush2.msra.mxu0 0.0
    %297 = vmatprep.subr.mxu0 0.0
    %298 = vmatpush2.msra.mxu0 0.0
    %299 = vmatprep.subr.mxu0 0.0
    %300 = vmatpush2.msra.mxu0 0.0
    %301 = vmatprep.subr.mxu0 0.0
    %302 = vmatpush2.msra.mxu0 0.0
    %303 = vmatprep.subr.mxu0 0.0
    %304 = vmatpush2.msra.mxu0 0.0
    %305 = vmatprep.subr.mxu0 0.0
    %306 = vmatpush2.msra.mxu0 0.0
    %307 = vmatprep.subr.mxu0 0.0
    %308 = vmatpush2.msra.mxu0 0.0
    %309 = vmatprep.subr.mxu0 0.0
    %310 = vmatpush2.msra.mxu0 0.0
    %311 = vmatprep.subr.mxu0 0.0
    %312 = vmatpush2.msra.mxu0 0.0
    %313 = vmatprep.subr.mxu0 0.0
    %314 = vmatpush2.msra.mxu0 0.0
    %315 = vmatprep.mubr.f32.mxu0 0.0
    %316 = vmatmul.mubr.f32.gmra.mxu0 %v248
    %v317 = vpop.f32.mrf.mxu0
    %v318 = vadd.f32 0.0, %v317
    %v319 = vpop.f32.mrf.mxu0
    %320 = vdwg.mxu0
    %v321 = vadd.f32 %v250, %v318
    %v322 = vtanh.pop %v321
    %s323 = scalar_lea.vmem %s0, 8
    %v324 = vld [vmem:[%s323] sm:$0x3]
    %325 = vmatprep.subr.mxu0 0.0
    %326 = vmatpush1.msra.mxu0 %v27
    %327 = vmatprep.subr.mxu0 0.0
    %328 = vmatpush1.msra.mxu0 %v26
    %329 = vmatprep.subr.mxu0 0.0
    %330 = vmatpush1.msra.mxu0 %v25
    %331 = vmatprep.subr.mxu0 0.0
    %332 = vmatpush1.msra.mxu0 %v24
    %333 = vmatprep.subr.mxu0 0.0
    %334 = vmatpush1.msra.mxu0 %v23
    %335 = vmatprep.subr.mxu0 0.0
    %336 = vmatpush1.msra.mxu0 %v22
    %337 = vmatprep.subr.mxu0 0.0
    %338 = vmatpush1.msra.mxu0 %v21
    %339 = vmatprep.subr.mxu0 0.0
    %340 = vmatpush1.msra.mxu0 %v20
    %341 = vmatprep.subr.mxu0 0.0
    %342 = vmatpush1.msra.mxu0 %v19
    %343 = vmatprep.subr.mxu0 0.0
    %344 = vmatpush1.msra.mxu0 %v18
    %345 = vmatprep.subr.mxu0 0.0
    %346 = vmatpush1.msra.mxu0 %v17
    %347 = vmatprep.subr.mxu0 0.0
    %348 = vmatpush1.msra.mxu0 %v16
    %349 = vmatprep.subr.mxu0 0.0
    %350 = vmatpush1.msra.mxu0 %v15
    %351 = vmatprep.subr.mxu0 0.0
    %352 = vmatpush1.msra.mxu0 %v14
    %353 = vmatprep.subr.mxu0 0.0
    %354 = vmatpush1.msra.mxu0 %v13
    %355 = vmatprep.subr.mxu0 0.0
    %356 = vmatpush1.msra.mxu0 %v12
    %357 = vmatprep.subr.mxu0 0.0
    %358 = vmatpush2.msra.mxu0 0.0
    %359 = vmatprep.subr.mxu0 0.0
    %360 = vmatpush2.msra.mxu0 0.0
    %361 = vmatprep.subr.mxu0 0.0
    %362 = vmatpush2.msra.mxu0 0.0
    %363 = vmatprep.subr.mxu0 0.0
    %364 = vmatpush2.msra.mxu0 0.0
    %365 = vmatprep.subr.mxu0 0.0
    %366 = vmatpush2.msra.mxu0 0.0
    %367 = vmatprep.subr.mxu0 0.0
    %368 = vmatpush2.msra.mxu0 0.0
    %369 = vmatprep.subr.mxu0 0.0
    %370 = vmatpush2.msra.mxu0 0.0
    %371 = vmatprep.subr.mxu0 0.0
    %372 = vmatpush2.msra.mxu0 0.0
    %373 = vmatprep.subr.mxu0 0.0
    %374 = vmatpush2.msra.mxu0 0.0
    %375 = vmatprep.subr.mxu0 0.0
    %376 = vmatpush2.msra.mxu0 0.0
    %377 = vmatprep.subr.mxu0 0.0
    %378 = vmatpush2.msra.mxu0 0.0
    %379 = vmatprep.subr.mxu0 0.0
    %380 = vmatpush2.msra.mxu0 0.0
    %381 = vmatprep.subr.mxu0 0.0
    %382 = vmatpush2.msra.mxu0 0.0
    %383 = vmatprep.subr.mxu0 0.0
    %384 = vmatpush2.msra.mxu0 0.0
    %385 = vmatprep.subr.mxu0 0.0
    %386 = vmatpush2.msra.mxu0 0.0
    %387 = vmatprep.subr.mxu0 0.0
    %388 = vmatpush2.msra.mxu0 0.0
    %389 = vmatprep.mubr.f32.mxu0 0.0
    %390 = vmatmul.mubr.f32.gmra.mxu0 %v322
    %v391 = vpop.f32.mrf.mxu0
    %v392 = vadd.f32 0.0, %v391
    %v393 = vpop.f32.mrf.mxu0
    %394 = vdwg.mxu0
    %v395 = vadd.f32 %v324, %v392
    %v396 = vtanh.pop %v395
    %s397 = scalar_lea.vmem %s0, 10
    %v398 = vld [vmem:[%s397] sm:$0x3]
    %399 = vmatprep.subr.mxu0 0.0
    %400 = vmatpush1.msra.mxu0 %v27
    %401 = vmatprep.subr.mxu0 0.0
    %402 = vmatpush1.msra.mxu0 %v26
    %403 = vmatprep.subr.mxu0 0.0
    %404 = vmatpush1.msra.mxu0 %v25
    %405 = vmatprep.subr.mxu0 0.0
    %406 = vmatpush1.msra.mxu0 %v24
    %407 = vmatprep.subr.mxu0 0.0
    %408 = vmatpush1.msra.mxu0 %v23
    %409 = vmatprep.subr.mxu0 0.0
    %410 = vmatpush1.msra.mxu0 %v22
    %411 = vmatprep.subr.mxu0 0.0
    %412 = vmatpush1.msra.mxu0 %v21
    %413 = vmatprep.subr.mxu0 0.0
    %414 = vmatpush1.msra.mxu0 %v20
    %415 = vmatprep.subr.mxu0 0.0
    %416 = vmatpush1.msra.mxu0 %v19
    %417 = vmatprep.subr.mxu0 0.0
    %418 = vmatpush1.msra.mxu0 %v18
    %419 = vmatprep.subr.mxu0 0.0
    %420 = vmatpush1.msra.mxu0 %v17
    %421 = vmatprep.subr.mxu0 0.0
    %422 = vmatpush1.msra.mxu0 %v16
    %423 = vmatprep.subr.mxu0 0.0
    %424 = vmatpush1.msra.mxu0 %v15
    %425 = vmatprep.subr.mxu0 0.0
    %426 = vmatpush1.msra.mxu0 %v14
    %427 = vmatprep.subr.mxu0 0.0
    %428 = vmatpush1.msra.mxu0 %v13
    %429 = vmatprep.subr.mxu0 0.0
    %430 = vmatpush1.msra.mxu0 %v12
    %431 = vmatprep.subr.mxu0 0.0
    %432 = vmatpush2.msra.mxu0 0.0
    %433 = vmatprep.subr.mxu0 0.0
    %434 = vmatpush2.msra.mxu0 0.0
    %435 = vmatprep.subr.mxu0 0.0
    %436 = vmatpush2.msra.mxu0 0.0
    %437 = vmatprep.subr.mxu0 0.0
    %438 = vmatpush2.msra.mxu0 0.0
    %439 = vmatprep.subr.mxu0 0.0
    %440 = vmatpush2.msra.mxu0 0.0
    %441 = vmatprep.subr.mxu0 0.0
    %442 = vmatpush2.msra.mxu0 0.0
    %443 = vmatprep.subr.mxu0 0.0
    %444 = vmatpush2.msra.mxu0 0.0
    %445 = vmatprep.subr.mxu0 0.0
    %446 = vmatpush2.msra.mxu0 0.0
    %447 = vmatprep.subr.mxu0 0.0
    %448 = vmatpush2.msra.mxu0 0.0
    %449 = vmatprep.subr.mxu0 0.0
    %450 = vmatpush2.msra.mxu0 0.0
    %451 = vmatprep.subr.mxu0 0.0
    %452 = vmatpush2.msra.mxu0 0.0
    %453 = vmatprep.subr.mxu0 0.0
    %454 = vmatpush2.msra.mxu0 0.0
    %455 = vmatprep.subr.mxu0 0.0
    %456 = vmatpush2.msra.mxu0 0.0
    %457 = vmatprep.subr.mxu0 0.0
    %458 = vmatpush2.msra.mxu0 0.0
    %459 = vmatprep.subr.mxu0 0.0
    %460 = vmatpush2.msra.mxu0 0.0
    %461 = vmatprep.subr.mxu0 0.0
    %462 = vmatpush2.msra.mxu0 0.0
    %463 = vmatprep.mubr.f32.mxu0 0.0
    %464 = vmatmul.mubr.f32.gmra.mxu0 %v396
    %v465 = vpop.f32.mrf.mxu0
    %v466 = vadd.f32 0.0, %v465
    %v467 = vpop.f32.mrf.mxu0
    %468 = vdwg.mxu0
    %v469 = vadd.f32 %v398, %v466
    %v470 = vtanh.pop %v469
    %s471 = scalar_lea.vmem %s0, 12
    %v472 = vld [vmem:[%s471] sm:$0x3]
    %473 = vmatprep.subr.mxu0 0.0
    %474 = vmatpush1.msra.mxu0 %v27
    %475 = vmatprep.subr.mxu0 0.0
    %476 = vmatpush1.msra.mxu0 %v26
    %477 = vmatprep.subr.mxu0 0.0
    %478 = vmatpush1.msra.mxu0 %v25
    %479 = vmatprep.subr.mxu0 0.0
    %480 = vmatpush1.msra.mxu0 %v24
    %481 = vmatprep.subr.mxu0 0.0
    %482 = vmatpush1.msra.mxu0 %v23
    %483 = vmatprep.subr.mxu0 0.0
    %484 = vmatpush1.msra.mxu0 %v22
    %485 = vmatprep.subr.mxu0 0.0
    %486 = vmatpush1.msra.mxu0 %v21
    %487 = vmatprep.subr.mxu0 0.0
    %488 = vmatpush1.msra.mxu0 %v20
    %489 = vmatprep.subr.mxu0 0.0
    %490 = vmatpush1.msra.mxu0 %v19
    %491 = vmatprep.subr.mxu0 0.0
    %492 = vmatpush1.msra.mxu0 %v18
    %493 = vmatprep.subr.mxu0 0.0
    %494 = vmatpush1.msra.mxu0 %v17
    %495 = vmatprep.subr.mxu0 0.0
    %496 = vmatpush1.msra.mxu0 %v16
    %497 = vmatprep.subr.mxu0 0.0
    %498 = vmatpush1.msra.mxu0 %v15
    %499 = vmatprep.subr.mxu0 0.0
    %500 = vmatpush1.msra.mxu0 %v14
    %501 = vmatprep.subr.mxu0 0.0
    %502 = vmatpush1.msra.mxu0 %v13
    %503 = vmatprep.subr.mxu0 0.0
    %504 = vmatpush1.msra.mxu0 %v12
    %505 = vmatprep.subr.mxu0 0.0
    %506 = vmatpush2.msra.mxu0 0.0
    %507 = vmatprep.subr.mxu0 0.0
    %508 = vmatpush2.msra.mxu0 0.0
    %509 = vmatprep.subr.mxu0 0.0
    %510 = vmatpush2.msra.mxu0 0.0
    %511 = vmatprep.subr.mxu0 0.0
    %512 = vmatpush2.msra.mxu0 0.0
    %513 = vmatprep.subr.mxu0 0.0
    %514 = vmatpush2.msra.mxu0 0.0
    %515 = vmatprep.subr.mxu0 0.0
    %516 = vmatpush2.msra.mxu0 0.0
    %517 = vmatprep.subr.mxu0 0.0
    %518 = vmatpush2.msra.mxu0 0.0
    %519 = vmatprep.subr.mxu0 0.0
    %520 = vmatpush2.msra.mxu0 0.0
    %521 = vmatprep.subr.mxu0 0.0
    %522 = vmatpush2.msra.mxu0 0.0
    %523 = vmatprep.subr.mxu0 0.0
    %524 = vmatpush2.msra.mxu0 0.0
    %525 = vmatprep.subr.mxu0 0.0
    %526 = vmatpush2.msra.mxu0 0.0
    %527 = vmatprep.subr.mxu0 0.0
    %528 = vmatpush2.msra.mxu0 0.0
    %529 = vmatprep.subr.mxu0 0.0
    %530 = vmatpush2.msra.mxu0 0.0
    %531 = vmatprep.subr.mxu0 0.0
    %532 = vmatpush2.msra.mxu0 0.0
    %533 = vmatprep.subr.mxu0 0.0
    %534 = vmatpush2.msra.mxu0 0.0
    %535 = vmatprep.subr.mxu0 0.0
    %536 = vmatpush2.msra.mxu0 0.0
    %537 = vmatprep.mubr.f32.mxu0 0.0
    %538 = vmatmul.mubr.f32.gmra.mxu0 %v470
    %v539 = vpop.f32.mrf.mxu0
    %v540 = vadd.f32 0.0, %v539
    %v541 = vpop.f32.mrf.mxu0
    %542 = vdwg.mxu0
    %v543 = vadd.f32 %v472, %v540
    %v544 = vtanh.pop %v543
    %s545 = scalar_lea.vmem %s0, 14
    %v546 = vld [vmem:[%s545] sm:$0x3]
    %547 = vmatprep.subr.mxu0 0.0
    %548 = vmatpush1.msra.mxu0 %v27
    %549 = vmatprep.subr.mxu0 0.0
    %550 = vmatpush1.msra.mxu0 %v26
    %551 = vmatprep.subr.mxu0 0.0
    %552 = vmatpush1.msra.mxu0 %v25
    %553 = vmatprep.subr.mxu0 0.0
    %554 = vmatpush1.msra.mxu0 %v24
    %555 = vmatprep.subr.mxu0 0.0
    %556 = vmatpush1.msra.mxu0 %v23
    %557 = vmatprep.subr.mxu0 0.0
    %558 = vmatpush1.msra.mxu0 %v22
    %559 = vmatprep.subr.mxu0 0.0
    %560 = vmatpush1.msra.mxu0 %v21
    %561 = vmatprep.subr.mxu0 0.0
    %562 = vmatpush1.msra.mxu0 %v20
    %563 = vmatprep.subr.mxu0 0.0
    %564 = vmatpush1.msra.mxu0 %v19
    %565 = vmatprep.subr.mxu0 0.0
    %566 = vmatpush1.msra.mxu0 %v18
    %567 = vmatprep.subr.mxu0 0.0
    %568 = vmatpush1.msra.mxu0 %v17
    %569 = vmatprep.subr.mxu0 0.0
    %570 = vmatpush1.msra.mxu0 %v16
    %571 = vmatprep.subr.mxu0 0.0
    %572 = vmatpush1.msra.mxu0 %v15
    %573 = vmatprep.subr.mxu0 0.0
    %574 = vmatpush1.msra.mxu0 %v14
    %575 = vmatprep.subr.mxu0 0.0
    %576 = vmatpush1.msra.mxu0 %v13
    %577 = vmatprep.subr.mxu0 0.0
    %578 = vmatpush1.msra.mxu0 %v12
    %579 = vmatprep.subr.mxu0 0.0
    %580 = vmatpush2.msra.mxu0 0.0
    %581 = vmatprep.subr.mxu0 0.0
    %582 = vmatpush2.msra.mxu0 0.0
    %583 = vmatprep.subr.mxu0 0.0
    %584 = vmatpush2.msra.mxu0 0.0
    %585 = vmatprep.subr.mxu0 0.0
    %586 = vmatpush2.msra.mxu0 0.0
    %587 = vmatprep.subr.mxu0 0.0
    %588 = vmatpush2.msra.mxu0 0.0
    %589 = vmatprep.subr.mxu0 0.0
    %590 = vmatpush2.msra.mxu0 0.0
    %591 = vmatprep.subr.mxu0 0.0
    %592 = vmatpush2.msra.mxu0 0.0
    %593 = vmatprep.subr.mxu0 0.0
    %594 = vmatpush2.msra.mxu0 0.0
    %595 = vmatprep.subr.mxu0 0.0
    %596 = vmatpush2.msra.mxu0 0.0
    %597 = vmatprep.subr.mxu0 0.0
    %598 = vmatpush2.msra.mxu0 0.0
    %599 = vmatprep.subr.mxu0 0.0
    %600 = vmatpush2.msra.mxu0 0.0
    %601 = vmatprep.subr.mxu0 0.0
    %602 = vmatpush2.msra.mxu0 0.0
    %603 = vmatprep.subr.mxu0 0.0
    %604 = vmatpush2.msra.mxu0 0.0
    %605 = vmatprep.subr.mxu0 0.0
    %606 = vmatpush2.msra.mxu0 0.0
    %607 = vmatprep.subr.mxu0 0.0
    %608 = vmatpush2.msra.mxu0 0.0
    %609 = vmatprep.subr.mxu0 0.0
    %610 = vmatpush2.msra.mxu0 0.0
    %611 = vmatprep.mubr.f32.mxu0 0.0
    %612 = vmatmul.mubr.f32.gmra.mxu0 %v544
    %v613 = vpop.f32.mrf.mxu0
    %v614 = vadd.f32 0.0, %v613
    %v615 = vpop.f32.mrf.mxu0
    %616 = vdwg.mxu0
    %v617 = vadd.f32 %v546, %v614
    %v618 = vtanh.pop %v617
    %619 = vst [vmem:[#allocation2] sm:$0x3] %v618
    // Predicated region
    $region10: #{_forward.1} parent=1 // pred_check
      _
    $region11: #{_forward.1} parent=1 // pred_check_branch
      %621 = sbr.rel (0) target = $region13
    $region12: #{_forward.1} parent=1 // pred_region
      %s623 = ssub.s32 32, 32
      %624 = vsyncadd [#allocation3], %s623
      %s626 = sshll.u32 [#allocation2], 4
      %s627 = int_to_ptr.vmem [resolvable:$true] %s626
      %629 = dma.vmem_to_hbm [thread:$0]  %s627, 32, %s2, [#allocation3]
    $region13: #{_forward.1} parent=1 // pred_fallthru
      _
    // Predicated region
    $region14: #{_forward.1} parent=1 // pred_check
      _
    $region15: #{_forward.1} parent=1 // pred_check_branch
      %631 = sbr.rel (0) target = $region17
    $region16: #{_forward.1} parent=1 // pred_region
      %632 = dma.done [#allocation3], 32
    $region17: #{_forward.1} parent=1 // pred_fallthru
      _
    %633 = vsyncpa [#allocation3], 1

</llo_original>
